<compile_context>
chip_gen: v7x
topology: tpu7x:2x2x1
jax: 0.10.0
libtpu: 0.0.40
codegen_flags: <defaults>
</compile_context>

<pallas_src>
import functools
import math

import jax
import jax.numpy as jnp
from jax import lax
from jax.experimental import pallas as pl
from jax.experimental.pallas import tpu as pltpu

_LANE = 128                       # vreg lane width: keep the last dim lane-dense
_MAX_TILE_BYTES = 2 * 1024 * 1024 # 2 MiB per VMEM buffer (safe on v5e/v6e/v7x)


def _round_up(x, m):
    return (x + m - 1) // m * m


def _i32(v):
    """Python int -> int32 constant with two's-complement wraparound."""
    v &= 0xFFFFFFFF
    return jnp.int32(v - (1 << 32) if v >= (1 << 31) else v)


def _lshr(x, n):
    """Logical right shift of an int32 array by a static amount n (VPU-only)."""
    return (x >> n) & jnp.int32((1 << (32 - n)) - 1)


def _mix_lowbias32(x):
    x = x ^ _lshr(x, 16)
    x = x * _i32(0x7FEB352D)
    x = x ^ _lshr(x, 15)
    x = x * _i32(0x846CA68B)
    x = x ^ _lshr(x, 16)
    return x


def _mix_murmur3(x):
    x = x ^ _lshr(x, 16)
    x = x * _i32(0x85EBCA6B)
    x = x ^ _lshr(x, 13)
    x = x * _i32(0xC2B2AE35)
    x = x ^ _lshr(x, 16)
    return x


def _bits_to_unit(bits):
    # Top 24 bits -> uniform in the open interval (0, 1); never 0, so log() is safe.
    return (_lshr(bits, 8).astype(jnp.float32) + jnp.float32(0.5)) * jnp.float32(
        1.0 / (1 << 24))


def _noise_kernel(seed_ref, x_ref, o_ref, *, alpha, tile_rows):
    """Add alpha * N(0,1) noise to one (tile_rows, 128) tile.

    seed_ref: (1,) int32 scalar-prefetch (SMEM) base seed
    x_ref:    (tile_rows, 128) input tile in VMEM
    o_ref:    (tile_rows, 128) output tile in VMEM
    """
    shp = x_ref.shape
    row = lax.broadcasted_iota(jnp.int32, shp, 0)
    lane = lax.broadcasted_iota(jnp.int32, shp, 1)
    # Global flat element index: unique across the grid and independent of the
    # tiling heuristic, so the noise stream only depends on (seed, element).
    gidx = (pl.program_id(0) * tile_rows + row) * shp[1] + lane

    c = gidx ^ (seed_ref[0] * _i32(0x9E3779B9))
    u1 = _bits_to_unit(_mix_lowbias32(c))
    u2 = _bits_to_unit(_mix_murmur3(c ^ _i32(0x7F4A7C15)))

    # Box-Muller: exact Gaussian from two uniforms.
    r = jnp.sqrt(jnp.float32(-2.0) * jnp.log(u1))
    z = r * jnp.cos(jnp.float32(2.0 * math.pi) * u2)

    x = x_ref[...].astype(jnp.float32)
    o_ref[...] = (x + jnp.float32(alpha) * z).astype(o_ref.dtype)


@functools.partial(jax.jit, static_argnames=("alpha", "training"))
def noise_forward(x, seed, *, alpha=0.1, training=True):
    """Forward pass of Noise: x + alpha*N(0,1) when training, identity otherwise."""
    if not training:
        return x

    total = math.prod(x.shape)
    if total == 0:
        return x

    itemsize = jnp.dtype(x.dtype).itemsize
    sub = 8 * max(1, 4 // itemsize)       # sublane packing: 8 f32, 16 bf16, 32 int8
    chunk = sub * _LANE
    rows = pl.cdiv(total, _LANE)

    aligned = (total % chunk == 0)
    if aligned:
        rows_w = rows
        x2d = x.reshape(rows_w, _LANE)    # metadata-only reshape: no HBM copy
    else:
        # Ragged tail: pad only up to the sublane multiple (< `chunk` elements
        # of waste), never up to a whole tile.
        rows_w = _round_up(rows, sub)
        flat = jnp.pad(jnp.ravel(x), (0, rows_w * _LANE - total))
        x2d = flat.reshape(rows_w, _LANE)

    # Tile sizing: <= 2 MiB/buffer (double-buffered in + out fits the v5e
    # 16 MiB scoped-VMEM default), and prefer >= 2 grid steps so the DMA
    # pipeline has depth and v7x megacore can split the parallel axis.
    max_tile_rows = max(sub, (_MAX_TILE_BYTES // (_LANE * itemsize)) // sub * sub)
    half_rows = _round_up(pl.cdiv(rows_w, 2), sub)
    tile_r = max(sub, min(max_tile_rows, half_rows))
    grid = (pl.cdiv(rows_w, tile_r),)

    n_elems = rows_w * _LANE
    seed_arr = jnp.reshape(jnp.asarray(seed, jnp.int32), (1,))

    out2d = pl.pallas_call(
        functools.partial(_noise_kernel, alpha=float(alpha), tile_rows=tile_r),
        out_shape=jax.ShapeDtypeStruct((rows_w, _LANE), x.dtype),
        grid_spec=pltpu.PrefetchScalarGridSpec(
            num_scalar_prefetch=1,
            grid=grid,
            in_specs=[pl.BlockSpec((tile_r, _LANE), lambda i, _seed: (i, 0))],
            out_specs=pl.BlockSpec((tile_r, _LANE), lambda i, _seed: (i, 0)),
        ),
        compiler_params=pltpu.CompilerParams(
            dimension_semantics=("parallel",)),
        cost_estimate=pl.CostEstimate(
            flops=40 * n_elems,
            transcendentals=3 * n_elems,
            bytes_accessed=2 * n_elems * itemsize),
    )(seed_arr, x2d)

    if aligned:
        return out2d.reshape(x.shape)
    return out2d.reshape(-1)[:total].reshape(x.shape)


if __name__ == "__main__":
    alpha = 0.1
    key = jax.random.PRNGKey(0)
    k_small, k_big = jax.random.split(key)

    # Small input consistent with the module's usage (batch=2, seq=8, hidden=32).
    x = jax.random.normal(k_small, (2, 8, 32), dtype=jnp.float32)
    y = noise_forward(x, 0, alpha=alpha, training=True)
    jax.block_until_ready(y)
    assert y.shape == x.shape and y.dtype == x.dtype
    assert not jnp.array_equal(y, x), "noise was not added"

    # Eval mode is the identity, exactly like the PyTorch module.
    y_eval = noise_forward(x, 0, alpha=alpha, training=False)
    assert jnp.array_equal(y_eval, x), "eval mode must be identity"

    # Larger input: aligned fast path, multi-tile pipelined grid. Check that
    # the noise statistics look like N(0, alpha^2) and that it is deterministic.
    xb = jax.random.normal(k_big, (2, 1024, 128), dtype=jnp.float32)
    yb = noise_forward(xb, 123, alpha=alpha, training=True)
    jax.block_until_ready(yb)
    nb = (yb - xb) / alpha
    mean = float(jnp.mean(nb))
    std = float(jnp.std(nb))
    assert abs(mean) < 0.05, f"noise mean off: {mean}"
    assert abs(std - 1.0) < 0.05, f"noise std off: {std}"

    # Different grid tiles must draw different noise (global-index counters).
    nflat = nb.reshape(-1)
    half = nflat.shape[0] // 2
    assert not jnp.array_equal(nflat[:half], nflat[half:]), "tiles reused noise"

    # Same seed -> identical output; different seed -> different noise.
    yb2 = noise_forward(xb, 123, alpha=alpha, training=True)
    assert jnp.array_equal(yb, yb2), "same seed must reproduce output"
    yb3 = noise_forward(xb, 124, alpha=alpha, training=True)
    assert not jnp.array_equal(yb, yb3), "different seed must change output"

    print("KERNEL_OK")
</pallas_src>

<mosaic_0001>
module attributes {stable_mosaic.version = 11 : i64} {
  func.func @_noise_kernel(%arg0: i32, %arg1: memref<1xi32, #tpu.memory_space<smem>>, %arg2: memref<8x128xf32, #tpu.memory_space<vmem>>, %arg3: memref<8x128xf32, #tpu.memory_space<vmem>>) attributes {dimension_semantics = [#tpu.dimension_semantics<parallel>], iteration_bounds = array<i64: 1>, scalar_prefetch = 1 : i64, scratch_operands = 0 : i64, tpu.core_type = #tpu.core_type<tc>, window_params = [{transform_indices = @transform_0, window_bounds = array<i64: 8, 128>}, {transform_indices = @transform_1, window_bounds = array<i64: 8, 128>}]} {
    %0 = tpu.iota {dimensions = array<i32: 0>} : vector<8x128xi32>
    %1 = tpu.iota {dimensions = array<i32: 1>} : vector<8x128xi32>
    %c8_i32 = arith.constant 8 : i32
    %2 = arith.muli %arg0, %c8_i32 : i32
    %3 = vector.broadcast %2 : i32 to vector<8x128xi32>
    %4 = arith.addi %3, %0 : vector<8x128xi32>
    %c128_i32 = arith.constant 128 : i32
    %5 = vector.broadcast %c128_i32 : i32 to vector<8x128xi32>
    %6 = arith.muli %4, %5 : vector<8x128xi32>
    %7 = arith.addi %6, %1 : vector<8x128xi32>
    %c0 = arith.constant 0 : index
    %8 = memref.load %arg1[%c0] : memref<1xi32, #tpu.memory_space<smem>>
    %c-1640531527_i32 = arith.constant -1640531527 : i32
    %9 = arith.muli %8, %c-1640531527_i32 : i32
    %10 = vector.broadcast %9 : i32 to vector<8x128xi32>
    %11 = arith.xori %7, %10 : vector<8x128xi32>
    %c16_i32 = arith.constant 16 : i32
    %12 = vector.broadcast %c16_i32 : i32 to vector<8x128xi32>
    %13 = arith.shrsi %11, %12 : vector<8x128xi32>
    %c65535_i32 = arith.constant 65535 : i32
    %14 = vector.broadcast %c65535_i32 : i32 to vector<8x128xi32>
    %15 = arith.andi %13, %14 : vector<8x128xi32>
    %16 = arith.xori %11, %15 : vector<8x128xi32>
    %c2146121005_i32 = arith.constant 2146121005 : i32
    %17 = vector.broadcast %c2146121005_i32 : i32 to vector<8x128xi32>
    %18 = arith.muli %16, %17 : vector<8x128xi32>
    %c15_i32 = arith.constant 15 : i32
    %19 = vector.broadcast %c15_i32 : i32 to vector<8x128xi32>
    %20 = arith.shrsi %18, %19 : vector<8x128xi32>
    %c131071_i32 = arith.constant 131071 : i32
    %21 = vector.broadcast %c131071_i32 : i32 to vector<8x128xi32>
    %22 = arith.andi %20, %21 : vector<8x128xi32>
    %23 = arith.xori %18, %22 : vector<8x128xi32>
    %c-2073254261_i32 = arith.constant -2073254261 : i32
    %24 = vector.broadcast %c-2073254261_i32 : i32 to vector<8x128xi32>
    %25 = arith.muli %23, %24 : vector<8x128xi32>
    %c16_i32_0 = arith.constant 16 : i32
    %26 = vector.broadcast %c16_i32_0 : i32 to vector<8x128xi32>
    %27 = arith.shrsi %25, %26 : vector<8x128xi32>
    %c65535_i32_1 = arith.constant 65535 : i32
    %28 = vector.broadcast %c65535_i32_1 : i32 to vector<8x128xi32>
    %29 = arith.andi %27, %28 : vector<8x128xi32>
    %30 = arith.xori %25, %29 : vector<8x128xi32>
    %c8_i32_2 = arith.constant 8 : i32
    %31 = vector.broadcast %c8_i32_2 : i32 to vector<8x128xi32>
    %32 = arith.shrsi %30, %31 : vector<8x128xi32>
    %c16777215_i32 = arith.constant 16777215 : i32
    %33 = vector.broadcast %c16777215_i32 : i32 to vector<8x128xi32>
    %34 = arith.andi %32, %33 : vector<8x128xi32>
    %35 = arith.sitofp %34 : vector<8x128xi32> to vector<8x128xf32>
    %cst = arith.constant 5.000000e-01 : f32
    %36 = vector.broadcast %cst : f32 to vector<8x128xf32>
    %37 = arith.addf %35, %36 : vector<8x128xf32>
    %cst_3 = arith.constant 5.96046448E-8 : f32
    %38 = vector.broadcast %cst_3 : f32 to vector<8x128xf32>
    %39 = arith.mulf %37, %38 : vector<8x128xf32>
    %c2135587861_i32 = arith.constant 2135587861 : i32
    %40 = vector.broadcast %c2135587861_i32 : i32 to vector<8x128xi32>
    %41 = arith.xori %11, %40 : vector<8x128xi32>
    %c16_i32_4 = arith.constant 16 : i32
    %42 = vector.broadcast %c16_i32_4 : i32 to vector<8x128xi32>
    %43 = arith.shrsi %41, %42 : vector<8x128xi32>
    %c65535_i32_5 = arith.constant 65535 : i32
    %44 = vector.broadcast %c65535_i32_5 : i32 to vector<8x128xi32>
    %45 = arith.andi %43, %44 : vector<8x128xi32>
    %46 = arith.xori %41, %45 : vector<8x128xi32>
    %c-2048144789_i32 = arith.constant -2048144789 : i32
    %47 = vector.broadcast %c-2048144789_i32 : i32 to vector<8x128xi32>
    %48 = arith.muli %46, %47 : vector<8x128xi32>
    %c13_i32 = arith.constant 13 : i32
    %49 = vector.broadcast %c13_i32 : i32 to vector<8x128xi32>
    %50 = arith.shrsi %48, %49 : vector<8x128xi32>
    %c524287_i32 = arith.constant 524287 : i32
    %51 = vector.broadcast %c524287_i32 : i32 to vector<8x128xi32>
    %52 = arith.andi %50, %51 : vector<8x128xi32>
    %53 = arith.xori %48, %52 : vector<8x128xi32>
    %c-1028477387_i32 = arith.constant -1028477387 : i32
    %54 = vector.broadcast %c-1028477387_i32 : i32 to vector<8x128xi32>
    %55 = arith.muli %53, %54 : vector<8x128xi32>
    %c16_i32_6 = arith.constant 16 : i32
    %56 = vector.broadcast %c16_i32_6 : i32 to vector<8x128xi32>
    %57 = arith.shrsi %55, %56 : vector<8x128xi32>
    %c65535_i32_7 = arith.constant 65535 : i32
    %58 = vector.broadcast %c65535_i32_7 : i32 to vector<8x128xi32>
    %59 = arith.andi %57, %58 : vector<8x128xi32>
    %60 = arith.xori %55, %59 : vector<8x128xi32>
    %c8_i32_8 = arith.constant 8 : i32
    %61 = vector.broadcast %c8_i32_8 : i32 to vector<8x128xi32>
    %62 = arith.shrsi %60, %61 : vector<8x128xi32>
    %c16777215_i32_9 = arith.constant 16777215 : i32
    %63 = vector.broadcast %c16777215_i32_9 : i32 to vector<8x128xi32>
    %64 = arith.andi %62, %63 : vector<8x128xi32>
    %65 = arith.sitofp %64 : vector<8x128xi32> to vector<8x128xf32>
    %cst_10 = arith.constant 5.000000e-01 : f32
    %66 = vector.broadcast %cst_10 : f32 to vector<8x128xf32>
    %67 = arith.addf %65, %66 : vector<8x128xf32>
    %cst_11 = arith.constant 5.96046448E-8 : f32
    %68 = vector.broadcast %cst_11 : f32 to vector<8x128xf32>
    %69 = arith.mulf %67, %68 : vector<8x128xf32>
    %70 = math.log %39 : vector<8x128xf32>
    %cst_12 = arith.constant -2.000000e+00 : f32
    %71 = vector.broadcast %cst_12 : f32 to vector<8x128xf32>
    %72 = arith.mulf %71, %70 : vector<8x128xf32>
    %73 = math.sqrt %72 : vector<8x128xf32>
    %cst_13 = arith.constant 6.28318548 : f32
    %74 = vector.broadcast %cst_13 : f32 to vector<8x128xf32>
    %75 = arith.mulf %74, %69 : vector<8x128xf32>
    %76 = math.cos %75 : vector<8x128xf32>
    %77 = arith.mulf %73, %76 : vector<8x128xf32>
    %c0_14 = arith.constant 0 : index
    %c0_15 = arith.constant 0 : index
    %78 = vector.load %arg2[%c0_14, %c0_15] : memref<8x128xf32, #tpu.memory_space<vmem>>, vector<8x128xf32>
    %cst_16 = arith.constant 1.000000e-01 : f32
    %79 = vector.broadcast %cst_16 : f32 to vector<8x128xf32>
    %80 = arith.mulf %79, %77 : vector<8x128xf32>
    %81 = arith.addf %78, %80 : vector<8x128xf32>
    %c0_17 = arith.constant 0 : index
    %c0_18 = arith.constant 0 : index
    %82 = vector.load %arg3[%c0_17, %c0_18] : memref<8x128xf32, #tpu.memory_space<vmem>>, vector<8x128xf32>
    tpu.vector_store %arg3[%c0_17, %c0_18], %81 {strides = array<i32>} : memref<8x128xf32, #tpu.memory_space<vmem>>, vector<8x128xf32>,
    return
  }
  func.func @transform_0(%arg0: i32, %arg1: memref<1xi32, #tpu.memory_space<smem>>) -> (i32, i32) {
    %c0_i32 = arith.constant 0 : i32
    %c0_i32_0 = arith.constant 0 : i32
    return %arg0, %c0_i32 : i32, i32
  }
  func.func @transform_1(%arg0: i32, %arg1: memref<1xi32, #tpu.memory_space<smem>>) -> (i32, i32) {
    %c0_i32 = arith.constant 0 : i32
    %c0_i32_0 = arith.constant 0 : i32
    return %arg0, %c0_i32 : i32, i32
  }
}

</mosaic_0001>

<llo_original>
// kernel: noise_forward.1
$region0: #{noise_forward.1}
  #allocation0 [shape = 'u32[]', space=smem, size = 0x4, offset = 0x4, fixed_abs, tag = 'smem constant byte address 0x4 - core index']
  #allocation1 [shape = 'u32[144,128]{1,0:T(1,128)}', space=vmem, size = 0x12000, scoped, tag = 'internal scratch']
  #allocation2 [shape = 's32[1]{0}', space=sflag, size = 0x4, scoped, tag = 'scoped memory for noise_forward.1']
  #allocation3 [shape = 's32[1]{0:T(128)S(6)}', space=smem, size = 0x200, scoped, tag = 'prefetched SMEM operand 0']
  %s0 = inlined_call_operand.<no memory space> [shape: s32[1], index: 0, kind: input, shape index: {}]
  %s1 = inlined_call_operand.vmem [shape: f32[8,128], index: 1, kind: input, shape index: {}]
  %s2 = inlined_call_operand.vmem [shape: f32[8,128], index: 2, kind: output, shape index: {}]
  %s3 = sld [smem:[#allocation0]]
  $region14: #{noise_forward.1} parent=0
    _
  %s5 = ssub.s32 1, %s3
  %s6 = scalar_select 0, %s5, %s3
  %7 = sst [smem:[#allocation3]] %s0
  // Predicated region
  $region2: #{noise_forward.1} parent=0 // pred_check
    _
  $region3: #{noise_forward.1} parent=0 // pred_check_branch
    %9 = sbr.rel (0) target = $region5
  $region4: #{noise_forward.1} parent=0 // pred_region
    _
  $region5: #{noise_forward.1} parent=0 // pred_fallthru
    _
  %v10 = vlaneseq
  %v11 = vshrl.u32 %v10, 7
  %v12 = vlaneseq
  %v13 = vand.u32 %v12, 127
  %s14 = smul.u32 0, 8
  %v15 = vstv %s14
  %v16 = vadd.s32 %v15, %v11
  %v17 = vmul.u32 %v16, 128
  %v18 = vadd.s32 %v17, %v13
  %s19 = sld [smem:[#allocation3]]
  %s20 = smul.u32 %s19, 2654435769
  %v21 = vstv %s20
  %v22 = vxor.u32 %v18, %v21
  %v23 = vshra.s32 %v22, 16
  %v24 = vand.u32 %v23, 65535
  %v25 = vxor.u32 %v22, %v24
  %v26 = vmul.u32 %v25, 2146121005
  %v27 = vshra.s32 %v26, 15
  %v28 = vand.u32 %v27, 131071
  %v29 = vxor.u32 %v26, %v28
  %v30 = vmul.u32 %v29, 2221713035
  %v31 = vshra.s32 %v30, 16
  %v32 = vand.u32 %v31, 65535
  %v33 = vxor.u32 %v30, %v32
  %v34 = vshra.s32 %v33, 8
  %v35 = vand.u32 %v34, 16777215
  %v36 = vcvt.s32.f32 %v35
  %v37 = vadd.f32 %v36, 0.5
  %v38 = vmul.f32 %v37, 5.9604645e-08
  %v39 = vxor.u32 %v22, 2135587861
  %v40 = vshra.s32 %v39, 16
  %v41 = vand.u32 %v40, 65535
  %v42 = vxor.u32 %v39, %v41
  %v43 = vmul.u32 %v42, 2246822507
  %v44 = vshra.s32 %v43, 13
  %v45 = vand.u32 %v44, 524287
  %v46 = vxor.u32 %v43, %v45
  %v47 = vmul.u32 %v46, 3266489909
  %v48 = vshra.s32 %v47, 16
  %v49 = vand.u32 %v48, 65535
  %v50 = vxor.u32 %v47, %v49
  %v51 = vshra.s32 %v50, 8
  %v52 = vand.u32 %v51, 16777215
  %v53 = vcvt.s32.f32 %v52
  %v54 = vadd.f32 %v53, 0.5
  %v55 = vmul.f32 %v54, 5.9604645e-08
  %v56 = vlog2.pop %v38
  %v57 = vmul.f32 %v56, 0.6931472
  %v58 = vmul.f32 %v57, -2.0
  %v59 = vrsqrt.pop %v58
  %v60 = vmul.f32 %v58, %v59
  %vm61 = vcmp.eq.f32.partialorder %v58, inf
  %v62 = vsel %vm61, %v58, %v60
  %vm63 = vcmp.eq.f32.partialorder %v58, 0.0
  %v64 = vand.u32 %v58, 2147483648
  %v65 = vsel %vm63, %v64, %v62
  %v66 = vmul.f32 %v55, 6.2831855
  %v67 = vand.u32 2147483647, %v66
  %vm68 = vcmp.le.f32.partialorder %v67, 0.7853982
  %vm69 = vcmp.lt.s32.totalorder %v66, 0
  %v70 = vand.u32 %v66, 2139095040
  %v71 = vshrl.u32 %v70, 23
  %v72 = vsub.s32 %v71, 127
  %v73 = vand.u32 2147483647, %v66
  %v74 = vand.u32 %v73, 8388607
  %v75 = vor.u32 %v74, 8388608
  %v76 = vsub.s32 0, %v75
  %v77 = vadd.s32 %v72, 1
  %vm78 = vcmp.gt.s32.totalorder %v77, 0
  %v79 = vsel %vm78, %v77, 0
  %v80 = vshrl.u32 %v79, 5
  %v81 = vand.u32 %v79, 31
  %v82 = vsub.s32 32, %v81
  %v83 = vshrl.u32 683565275, %v82
  %v84 = vshll.u32 683565275, %v81
  %v85 = vshrl.u32 2475754826, %v82
  %v86 = vor.u32 %v84, %v85
  %v87 = vshll.u32 2475754826, %v81
  %v88 = vshrl.u32 2131351028, %v82
  %v89 = vor.u32 %v87, %v88
  %v90 = vshll.u32 2131351028, %v81
  %v91 = vshrl.u32 2102212464, %v82
  %v92 = vor.u32 %v90, %v91
  %v93 = vshll.u32 2102212464, %v81
  %v94 = vshrl.u32 920167782, %v82
  %v95 = vor.u32 %v93, %v94
  %v96 = vshll.u32 920167782, %v81
  %v97 = vshrl.u32 1326507024, %v82
  %v98 = vor.u32 %v96, %v97
  %vm99 = vcmp.lt.s32.totalorder %v80, 1
  %vm100 = vcmp.lt.s32.totalorder %v80, 2
  %vm101 = vcmp.lt.s32.totalorder %v80, 3
  %vm102 = vcmp.lt.s32.totalorder %v80, 4
  %v103 = vsel %vm99, %v83, %v86
  %v104 = vsel %vm102, %v92, 2102212464
  %v105 = vsel %vm101, %v89, %v104
  %v106 = vsel %vm100, %v103, %v105
  %v107 = vsel %vm99, %v86, %v89
  %v108 = vsel %vm102, %v95, 920167782
  %v109 = vsel %vm101, %v92, %v108
  %v110 = vsel %vm100, %v107, %v109
  %v111 = vsel %vm99, %v89, %v92
  %v112 = vsel %vm102, %v98, 1326507024
  %v113 = vsel %vm101, %v95, %v112
  %v114 = vsel %vm100, %v111, %v113
  %v115 = vshll.u32 %v75, 8
  %v116 = vmul.u32.u64.compose %v115, %v114
  %v117 = vextract.low.u32 %v116
  %v118 = vextract.high.u32 %v116
  %v119 = vmul.u32.u64.compose %v115, %v110
  %v120 = vextract.low.u32 %v119
  %v121 = vextract.high.u32 %v119
  %v122 = vmul.u32 %v115, %v106
  %v123 = vadd.s32 %v118, %v120
  %vm124 = vc.u32 %v118, %v120
  %v125 = vadd.s32 %v121, 1
  %v126 = vsel %vm124, %v125, %v121
  %v127 = vadd.s32 %v122, %v126
  %v128 = vadd.s32 %v127, 536870912
  %v129 = vshrl.u32 %v128, 30
  %v130 = vshll.u32 %v129, 30
  %v131 = vsub.s32 %v127, %v130
  %vm132 = vcmp.lt.s32.totalorder %v131, 0
  %v133 = vsub.s32 0, %v131
  %v134 = vsel %vm132, %v133, %v131
  %v135 = vclz %v134
  %v136 = vsub.s32 %v135, 2
  %vm137 = vcmp.gt.s32.totalorder 0, %v136
  %v138 = vsel %vm137, 0, %v136
  %v139 = vsub.s32 32, %v138
  %v140 = vshll.u32 %v131, %v138
  %v141 = vshrl.u32 %v123, %v139
  %v142 = vor.u32 %v140, %v141
  %v143 = vsub.s32 4294967266, %v138
  %v144 = vadd.s32 %v143, 127
  %v145 = vshll.u32 %v144, 23
  %v146 = vor.u32 4788187, %v145
  %v147 = vand.u32 2147483647, %v146
  %v149 = vcvt.s32.f32 %v142
  %v150 = vmul.f32 %v149, %v147
  %v151 = vxor.u32 %v150, 2147483648
  %v152 = vsel %vm69, %v151, %v150
  %v153 = vsub.s32 4, %v129
  %v154 = vsel %vm69, %v153, %v129
  %v155 = vsel %vm68, %v66, %v152
  %v156 = vsel %vm68, 0, %v154
  %v157 = vcosq.f32.pop %v155
  %v158 = vsinq.f32.pop %v155
  %vm159 = vweird.f32 %v66
  %v160 = vand.u32 %v156, 3
  %vm161 = vcmp.lt.s32.totalorder %v160, 2
  %vm162 = vcmp.eq.s32.totalorder %v160, 0
  %v163 = vxor.u32 %v158, 2147483648
  %v164 = vsel %vm162, %v157, %v163
  %vm165 = vcmp.eq.s32.totalorder %v160, 2
  %v166 = vxor.u32 %v157, 2147483648
  %v167 = vsel %vm165, %v166, %v158
  %v168 = vsel %vm161, %v164, %v167
  %v169 = vsel %vm159, nan, %v168
  %v170 = vmul.f32 %v65, %v169
  %v171 = vld [vmem:[%s1] sm:$0xff]
  %v172 = vmul.f32 %v170, 0.1
  %v173 = vadd.f32 %v171, %v172
  %174 = vst [vmem:[%s2] sm:$0xff] %v173
  // Predicated region
  $region6: #{noise_forward.1} parent=0 // pred_check
    _
  $region7: #{noise_forward.1} parent=0 // pred_check_branch
    %176 = sbr.rel (0) target = $region9
  $region8: #{noise_forward.1} parent=0 // pred_region
    _
  $region9: #{noise_forward.1} parent=0 // pred_fallthru
    _
  // Predicated region
  $region10: #{noise_forward.1} parent=0 // pred_check
    _
  $region11: #{noise_forward.1} parent=0 // pred_check_branch
    %178 = sbr.rel (0) target = $region13
  $region12: #{noise_forward.1} parent=0 // pred_region
    _
  $region13: #{noise_forward.1} parent=0 // pred_fallthru
    _

</llo_original>
